<compile_context>
chip_gen: v7x
topology: tpu7x:2x2x1
jax: 0.10.0
libtpu: 0.0.40
codegen_flags: <defaults>
</compile_context>

<pallas_src>
import functools

import jax
import jax.numpy as jnp
from jax.experimental import pallas as pl
from jax.experimental.pallas import tpu as pltpu


def _round_up(n, m):
    return ((n + m - 1) // m) * m


def _snn_mlp_kernel(x_ref, w1_ref, w2_ref, o_ref, *, threshold):
    # First Linear + LIF spike (hard threshold, initial membrane v = 0).
    v1 = jnp.dot(x_ref[...], w1_ref[...], preferred_element_type=jnp.float32)
    # Spikes are exactly 0/1, so casting to the (possibly bf16) W2 dtype is exact.
    s1 = (v1 >= threshold).astype(w2_ref.dtype)
    # Second Linear + LIF spike.
    v2 = jnp.dot(s1, w2_ref[...], preferred_element_type=jnp.float32)
    o_ref[...] = (v2 >= threshold).astype(o_ref.dtype)


def snn_mlp_forward(x, w1, w2, threshold, *, batch_tile=None,
                    out_dtype=jnp.float32, matmul_dtype=None):
    """x: [B, E]; w1: [E, H]; w2: [H, C] (pre-transposed) -> spikes [B, C].

    matmul_dtype: optional operand dtype for the matmuls (e.g. jnp.bfloat16).
                  None keeps the exact f32 semantics of the PyTorch module.
    out_dtype:    spike output dtype; 0/1 is exact in bf16 and halves writeback.
    """
    B, E = x.shape
    E2, H = w1.shape
    H2, C = w2.shape
    assert E == E2 and H == H2

    LANE, SUBLANE = 128, 8

    if matmul_dtype is not None:
        x = x.astype(matmul_dtype)
        w1 = w1.astype(matmul_dtype)
        w2 = w2.astype(matmul_dtype)

    # Lane-dense output: pad W2 columns (and the output block) to 128 lanes.
    c_pad = _round_up(C, LANE)
    if c_pad != C:
        w2 = jnp.pad(w2, ((0, 0), (0, c_pad - C)))

    # Batch tiling: single grid step for small B, 512-row tiles for large B.
    # (512x128 f32 output tile x 2 buffers = 512 KiB -> fits every generation,
    #  including v7x's 64 MiB VMEM, with huge headroom.)
    if batch_tile is None:
        batch_tile = min(_round_up(B, SUBLANE), 512)
    batch_tile = _round_up(batch_tile, SUBLANE)
    b_pad = _round_up(B, batch_tile)
    if b_pad != B:
        x = jnp.pad(x, ((0, b_pad - B), (0, 0)))

    kernel = functools.partial(_snn_mlp_kernel, threshold=float(threshold))

    out = pl.pallas_call(
        kernel,
        out_shape=jax.ShapeDtypeStruct((b_pad, c_pad), out_dtype),
        grid_spec=pltpu.PrefetchScalarGridSpec(
            num_scalar_prefetch=0,
            grid=(b_pad // batch_tile,),
            in_specs=[
                pl.BlockSpec((batch_tile, E), lambda i: (i, 0)),  # x batch tile
                pl.BlockSpec((E, H), lambda i: (0, 0)),           # full W1 (grid-invariant)
                pl.BlockSpec((H, c_pad), lambda i: (0, 0)),       # full padded W2
            ],
            out_specs=pl.BlockSpec((batch_tile, c_pad), lambda i: (i, 0)),
        ),
        compiler_params=pltpu.CompilerParams(
            dimension_semantics=("parallel",),
        ),
    )(x, w1, w2)

    # Drop batch padding and the zero-padded (always-0) output columns.
    return out[:B, :C]


def snn_mlp_reference(x, w1, w2, threshold, matmul_dtype=None):
    """Pure-JAX reference mirroring the kernel's dtype path."""
    if matmul_dtype is not None:
        x = x.astype(matmul_dtype)
        w1 = w1.astype(matmul_dtype)
        w2 = w2.astype(matmul_dtype)
    v1 = jnp.dot(x, w1, preferred_element_type=jnp.float32)
    s1 = (v1 >= threshold).astype(w2.dtype)
    v2 = jnp.dot(s1, w2, preferred_element_type=jnp.float32)
    return (v2 >= threshold).astype(jnp.float32)


if __name__ == "__main__":
    # Config implied by the PyTorch module's __init__ (small demo sizes).
    num_encoders = 32     # input feature size
    hidden_size = 128
    num_classes = 16
    threshold_value = 1.0
    batch = 16

    key = jax.random.PRNGKey(0)
    kx, k1, k2 = jax.random.split(key, 3)

    # Deterministic parameter init (uniform, roughly Kaiming-scaled like nn.Linear).
    x = jax.random.normal(kx, (batch, num_encoders), dtype=jnp.float32)
    w1 = jax.random.uniform(
        k1, (num_encoders, hidden_size), dtype=jnp.float32,
        minval=-1.0 / float(num_encoders) ** 0.5,
        maxval=1.0 / float(num_encoders) ** 0.5)
    w2 = jax.random.uniform(
        k2, (hidden_size, num_classes), dtype=jnp.float32,
        minval=-1.0 / float(hidden_size) ** 0.5,
        maxval=1.0 / float(hidden_size) ** 0.5)

    # 1) Exact f32 path (matches the PyTorch module numerics bit-for-bit).
    out = jax.block_until_ready(snn_mlp_forward(x, w1, w2, threshold_value))
    ref = snn_mlp_reference(x, w1, w2, threshold_value)
    assert out.shape == (batch, num_classes)
    assert out.dtype == jnp.float32
    assert bool(jnp.all(out == ref))

    # 2) bf16 operand / bf16 spike-output fast path (spikes stay exact 0/1;
    #    weight cast is the documented accuracy/perf tradeoff).
    out_bf16 = jax.block_until_ready(
        snn_mlp_forward(x, w1, w2, threshold_value,
                        matmul_dtype=jnp.bfloat16, out_dtype=jnp.bfloat16))
    ref_bf16 = snn_mlp_reference(x, w1, w2, threshold_value,
                                 matmul_dtype=jnp.bfloat16)
    assert out_bf16.shape == (batch, num_classes)
    assert bool(jnp.all(out_bf16.astype(jnp.float32) == ref_bf16))

    print("KERNEL_OK")
</pallas_src>

<mosaic_0001>
module attributes {stable_mosaic.version = 11 : i64} {
  func.func @_snn_mlp_kernel(%arg0: i32, %arg1: memref<16x32xf32, #tpu.memory_space<vmem>>, %arg2: memref<32x128xf32, #tpu.memory_space<vmem>>, %arg3: memref<128x128xf32, #tpu.memory_space<vmem>>, %arg4: memref<16x128xf32, #tpu.memory_space<vmem>>) attributes {dimension_semantics = [#tpu.dimension_semantics<parallel>], iteration_bounds = array<i64: 1>, scalar_prefetch = 0 : i64, scratch_operands = 0 : i64, tpu.core_type = #tpu.core_type<tc>, window_params = [{transform_indices = @transform_0, window_bounds = array<i64: 16, 32>}, {pipeline_mode = #tpu.pipeline_mode<synchronous>, transform_indices = @transform_1, window_bounds = array<i64: 32, 128>}, {pipeline_mode = #tpu.pipeline_mode<synchronous>, transform_indices = @transform_2, window_bounds = array<i64: 128, 128>}, {transform_indices = @transform_3, window_bounds = array<i64: 16, 128>}]} {
    %c0 = arith.constant 0 : index
    %c0_0 = arith.constant 0 : index
    %0 = vector.load %arg1[%c0, %c0_0] : memref<16x32xf32, #tpu.memory_space<vmem>>, vector<16x32xf32>
    %c0_1 = arith.constant 0 : index
    %c0_2 = arith.constant 0 : index
    %1 = vector.load %arg2[%c0_1, %c0_2] : memref<32x128xf32, #tpu.memory_space<vmem>>, vector<32x128xf32>
    %cst = arith.constant dense<0.000000e+00> : vector<16x128xf32>
    %2 = tpu.matmul %0, %1, %cst {dimension_numbers = #tpu.dot_dimension_numbers<[1], [0], [0], [1], [0, 0, 1, 1], [], []>} : vector<16x32xf32>, vector<32x128xf32>, vector<16x128xf32> -> vector<16x128xf32>
    %cst_3 = arith.constant 1.000000e+00 : f32
    %3 = vector.broadcast %cst_3 : f32 to vector<16x128xf32>
    %4 = arith.cmpf oge, %2, %3 : vector<16x128xf32>
    %5 = arith.extui %4 : vector<16x128xi1> to vector<16x128xi32>
    %6 = arith.sitofp %5 : vector<16x128xi32> to vector<16x128xf32>
    %c0_4 = arith.constant 0 : index
    %c0_5 = arith.constant 0 : index
    %7 = vector.load %arg3[%c0_4, %c0_5] : memref<128x128xf32, #tpu.memory_space<vmem>>, vector<128x128xf32>
    %cst_6 = arith.constant dense<0.000000e+00> : vector<16x128xf32>
    %8 = tpu.matmul %6, %7, %cst_6 {dimension_numbers = #tpu.dot_dimension_numbers<[1], [0], [0], [1], [0, 0, 1, 1], [], []>} : vector<16x128xf32>, vector<128x128xf32>, vector<16x128xf32> -> vector<16x128xf32>
    %cst_7 = arith.constant 1.000000e+00 : f32
    %9 = vector.broadcast %cst_7 : f32 to vector<16x128xf32>
    %10 = arith.cmpf oge, %8, %9 : vector<16x128xf32>
    %11 = arith.extui %10 : vector<16x128xi1> to vector<16x128xi32>
    %12 = arith.sitofp %11 : vector<16x128xi32> to vector<16x128xf32>
    %c0_8 = arith.constant 0 : index
    %c0_9 = arith.constant 0 : index
    %13 = vector.load %arg4[%c0_8, %c0_9] : memref<16x128xf32, #tpu.memory_space<vmem>>, vector<16x128xf32>
    tpu.vector_store %arg4[%c0_8, %c0_9], %12 {strides = array<i32>} : memref<16x128xf32, #tpu.memory_space<vmem>>, vector<16x128xf32>,
    return
  }
  func.func @transform_0(%arg0: i32) -> (i32, i32) {
    %c0_i32 = arith.constant 0 : i32
    %c0_i32_0 = arith.constant 0 : i32
    return %arg0, %c0_i32 : i32, i32
  }
  func.func @transform_1(%arg0: i32) -> (i32, i32) {
    %c0_i32 = arith.constant 0 : i32
    %c0_i32_0 = arith.constant 0 : i32
    %c0_i32_1 = arith.constant 0 : i32
    return %c0_i32, %c0_i32_0 : i32, i32
  }
  func.func @transform_2(%arg0: i32) -> (i32, i32) {
    %c0_i32 = arith.constant 0 : i32
    %c0_i32_0 = arith.constant 0 : i32
    %c0_i32_1 = arith.constant 0 : i32
    return %c0_i32, %c0_i32_0 : i32, i32
  }
  func.func @transform_3(%arg0: i32) -> (i32, i32) {
    %c0_i32 = arith.constant 0 : i32
    %c0_i32_0 = arith.constant 0 : i32
    return %arg0, %c0_i32 : i32, i32
  }
}

</mosaic_0001>

<llo_original>
// kernel: tpu_custom_call.1
$region0: #{tpu_custom_call.1}
  #allocation0 [shape = 'u32[]', space=smem, size = 0x4, offset = 0x4, fixed_abs, tag = 'smem constant byte address 0x4 - core index']
  #allocation1 [shape = 'u32[144,128]{1,0:T(1,128)}', space=vmem, size = 0x12000, scoped, tag = 'internal scratch']
  %s0 = inlined_call_operand.hbm [shape: f32[16,32], index: 0, kind: input, shape index: {}]
  %s1 = inlined_call_operand.hbm [shape: f32[32,128], index: 1, kind: input, shape index: {}]
  %s2 = inlined_call_operand.hbm [shape: f32[128,128], index: 2, kind: input, shape index: {}]
  %s3 = inlined_call_operand.hbm [shape: f32[16,128], index: 3, kind: output, shape index: {}]
  %s4 = sld [smem:[#allocation0]]
  $region34: #{tpu_custom_call.1} parent=0
    _
  %s6 = ssub.s32 1, %s4
  %s7 = scalar_select 0, %s6, %s4
  $region1: #{tpu_custom_call.1} parent=0
    #allocation2 [shape = 'u8[8192]{0}', space=vmem, size = 0x2000, scoped, tag = 'input window, operand 0, single buffered']
    #allocation3 [shape = 's32[1]{0}', space=sflag, size = 0x4, scoped, tag = 'scoped memory for tpu_custom_call.1']
    #allocation4 [shape = 's32[1]{0}', space=sflag, size = 0x4, scoped, tag = 'scoped memory for tpu_custom_call.1']
    #allocation5 [shape = 'u8[16384]{0}', space=vmem, size = 0x4000, scoped, tag = 'input window, operand 1, single buffered']
    #allocation6 [shape = 's32[1]{0}', space=sflag, size = 0x4, scoped, tag = 'scoped memory for tpu_custom_call.1']
    #allocation7 [shape = 'u8[65536]{0}', space=vmem, size = 0x10000, scoped, tag = 'input window, operand 2, single buffered']
    #allocation8 [shape = 'u8[8192]{0}', space=vmem, size = 0x2000, scoped, tag = 'output window, operand 0, single buffered']
    %8 = vsyncpa [#allocation3], 0
    %9 = vsyncpa [#allocation6], 0
    %10 = vsyncpa [#allocation4], 0
    // Predicated region
    $region2: #{tpu_custom_call.1} parent=1 // pred_check
      _
    $region3: #{tpu_custom_call.1} parent=1 // pred_check_branch
      %12 = sbr.rel (0) target = $region5
    $region4: #{tpu_custom_call.1} parent=1 // pred_region
      %s14 = ssub.s32 256, 256
      %15 = vsyncadd [#allocation3], %s14
      %s16 = sshll.u32 [#allocation2], 4
      %s17 = int_to_ptr.vmem [resolvable:$true] %s16
      %22 = dma.hbm_to_vmem [thread:$0]  %s0, 256, %s17, [#allocation3], 128, 128, 8
    $region5: #{tpu_custom_call.1} parent=1 // pred_fallthru
      _
    // Predicated region
    $region6: #{tpu_custom_call.1} parent=1 // pred_check
      _
    $region7: #{tpu_custom_call.1} parent=1 // pred_check_branch
      %24 = sbr.rel (0) target = $region9
    $region8: #{tpu_custom_call.1} parent=1 // pred_region
      %s26 = ssub.s32 512, 512
      %27 = vsyncadd [#allocation6], %s26
      %s28 = sshll.u32 [#allocation5], 4
      %s29 = int_to_ptr.vmem [resolvable:$true] %s28
      %34 = dma.hbm_to_vmem [thread:$0]  %s1, 512, %s29, [#allocation6], 128, 128, 8
    $region9: #{tpu_custom_call.1} parent=1 // pred_fallthru
      _
    // Predicated region
    $region10: #{tpu_custom_call.1} parent=1 // pred_check
      _
    $region11: #{tpu_custom_call.1} parent=1 // pred_check_branch
      %36 = sbr.rel (0) target = $region13
    $region12: #{tpu_custom_call.1} parent=1 // pred_region
      %s38 = ssub.s32 2048, 2048
      %39 = vsyncadd [#allocation6], %s38
      %s40 = sshll.u32 [#allocation7], 4
      %s41 = int_to_ptr.vmem [resolvable:$true] %s40
      %46 = dma.hbm_to_vmem [thread:$0]  %s2, 2048, %s41, [#allocation6], 128, 128, 8
    $region13: #{tpu_custom_call.1} parent=1 // pred_fallthru
      _
    // Predicated region
    $region14: #{tpu_custom_call.1} parent=1 // pred_check
      _
    $region15: #{tpu_custom_call.1} parent=1 // pred_check_branch
      %48 = sbr.rel (0) target = $region17
    $region16: #{tpu_custom_call.1} parent=1 // pred_region
      %49 = dma.done [#allocation3], 256
    $region17: #{tpu_custom_call.1} parent=1 // pred_fallthru
      _
    // Predicated region
    $region18: #{tpu_custom_call.1} parent=1 // pred_check
      _
    $region19: #{tpu_custom_call.1} parent=1 // pred_check_branch
      %51 = sbr.rel (0) target = $region21
    $region20: #{tpu_custom_call.1} parent=1 // pred_region
      %52 = dma.done [#allocation6], 512
    $region21: #{tpu_custom_call.1} parent=1 // pred_fallthru
      _
    // Predicated region
    $region22: #{tpu_custom_call.1} parent=1 // pred_check
      _
    $region23: #{tpu_custom_call.1} parent=1 // pred_check_branch
      %54 = sbr.rel (0) target = $region25
    $region24: #{tpu_custom_call.1} parent=1 // pred_region
      %55 = dma.done [#allocation6], 2048
    $region25: #{tpu_custom_call.1} parent=1 // pred_fallthru
      _
    %v56 = vld [vmem:[#allocation2] sm:$0xff]
    %v57 = vld [vmem:[#allocation2 + $0x8] sm:$0xff]
    %v58 = vld [vmem:[#allocation5] sm:$0xff]
    %v59 = vld [vmem:[#allocation5 + $0x8] sm:$0xff]
    %v60 = vld [vmem:[#allocation5 + $0x10] sm:$0xff]
    %v61 = vld [vmem:[#allocation5 + $0x18] sm:$0xff]
    %vm62 = vcmask 261120
    %v64 = vsel %vm62, %v56, 0
    %v67 = vsel %vm62, %v57, 0
    %69 = vmatprep.subr.mxu0 0.0
    %70 = vmatpush1.msra.mxu0 %v58
    %71 = vmatprep.subr.mxu0 0.0
    %72 = vmatpush1.msra.mxu0 %v59
    %73 = vmatprep.subr.mxu0 0.0
    %74 = vmatpush1.msra.mxu0 %v60
    %75 = vmatprep.subr.mxu0 0.0
    %76 = vmatpush1.msra.mxu0 %v61
    %77 = vmatprep.subr.mxu0 0.0
    %78 = vmatpush1.msra.mxu0 0.0
    %79 = vmatprep.subr.mxu0 0.0
    %80 = vmatpush1.msra.mxu0 0.0
    %81 = vmatprep.subr.mxu0 0.0
    %82 = vmatpush1.msra.mxu0 0.0
    %83 = vmatprep.subr.mxu0 0.0
    %84 = vmatpush1.msra.mxu0 0.0
    %85 = vmatprep.subr.mxu0 0.0
    %86 = vmatpush1.msra.mxu0 0.0
    %87 = vmatprep.subr.mxu0 0.0
    %88 = vmatpush1.msra.mxu0 0.0
    %89 = vmatprep.subr.mxu0 0.0
    %90 = vmatpush1.msra.mxu0 0.0
    %91 = vmatprep.subr.mxu0 0.0
    %92 = vmatpush1.msra.mxu0 0.0
    %93 = vmatprep.subr.mxu0 0.0
    %94 = vmatpush1.msra.mxu0 0.0
    %95 = vmatprep.subr.mxu0 0.0
    %96 = vmatpush1.msra.mxu0 0.0
    %97 = vmatprep.subr.mxu0 0.0
    %98 = vmatpush1.msra.mxu0 0.0
    %99 = vmatprep.subr.mxu0 0.0
    %100 = vmatpush1.msra.mxu0 0.0
    %101 = vmatprep.subr.mxu0 0.0
    %102 = vmatpush1.msra.mxu0 0.0
    %103 = vmatprep.subr.mxu0 0.0
    %104 = vmatpush1.msra.mxu0 0.0
    %105 = vmatprep.subr.mxu0 0.0
    %106 = vmatpush1.msra.mxu0 0.0
    %107 = vmatprep.subr.mxu0 0.0
    %108 = vmatpush1.msra.mxu0 0.0
    %109 = vmatprep.subr.mxu0 0.0
    %110 = vmatpush1.msra.mxu0 0.0
    %111 = vmatprep.subr.mxu0 0.0
    %112 = vmatpush1.msra.mxu0 0.0
    %113 = vmatprep.subr.mxu0 0.0
    %114 = vmatpush1.msra.mxu0 0.0
    %115 = vmatprep.subr.mxu0 0.0
    %116 = vmatpush1.msra.mxu0 0.0
    %117 = vmatprep.subr.mxu0 0.0
    %118 = vmatpush1.msra.mxu0 0.0
    %119 = vmatprep.subr.mxu0 0.0
    %120 = vmatpush1.msra.mxu0 0.0
    %121 = vmatprep.subr.mxu0 0.0
    %122 = vmatpush1.msra.mxu0 0.0
    %123 = vmatprep.subr.mxu0 0.0
    %124 = vmatpush1.msra.mxu0 0.0
    %125 = vmatprep.subr.mxu0 0.0
    %126 = vmatpush1.msra.mxu0 0.0
    %127 = vmatprep.subr.mxu0 0.0
    %128 = vmatpush1.msra.mxu0 0.0
    %129 = vmatprep.subr.mxu0 0.0
    %130 = vmatpush1.msra.mxu0 0.0
    %131 = vmatprep.subr.mxu0 0.0
    %132 = vmatpush1.msra.mxu0 0.0
    %133 = vmatprep.mubr.f32.mxu0 0.0
    %134 = vmatmul.mubr.f32.gmra.mrb[0].mxu0 %v64
    %v135 = vpop.f32.mrb[0].mxu0
    %v136 = vadd.f32 0.0, %v135
    %v137 = vpop.f32.mrb[0].mxu0
    %138 = vmatprep.mubr.f32.mxu0 0.0
    %139 = vmatmul.mubr.f32.gmra.mrb[0].mxu0 %v67
    %v140 = vpop.f32.mrb[0].mxu0
    %v141 = vadd.f32 0.0, %v140
    %v142 = vpop.f32.mrb[0].mxu0
    %143 = vdwg.mxu0
    %vm144 = vcmp.ge.f32.partialorder %v136, 1.0
    %vm145 = vcmp.ge.f32.partialorder %v141, 1.0
    %v146 = vsel %vm144, 1, 0
    %v147 = vsel %vm145, 1, 0
    %v148 = vcvt.s32.f32 %v146
    %v149 = vcvt.s32.f32 %v147
    %v150 = vld [vmem:[#allocation7] sm:$0xff]
    %v151 = vld [vmem:[#allocation7 + $0x8] sm:$0xff]
    %v152 = vld [vmem:[#allocation7 + $0x10] sm:$0xff]
    %v153 = vld [vmem:[#allocation7 + $0x18] sm:$0xff]
    %v154 = vld [vmem:[#allocation7 + $0x20] sm:$0xff]
    %v155 = vld [vmem:[#allocation7 + $0x28] sm:$0xff]
    %v156 = vld [vmem:[#allocation7 + $0x30] sm:$0xff]
    %v157 = vld [vmem:[#allocation7 + $0x38] sm:$0xff]
    %v158 = vld [vmem:[#allocation7 + $0x40] sm:$0xff]
    %v159 = vld [vmem:[#allocation7 + $0x48] sm:$0xff]
    %v160 = vld [vmem:[#allocation7 + $0x50] sm:$0xff]
    %v161 = vld [vmem:[#allocation7 + $0x58] sm:$0xff]
    %v162 = vld [vmem:[#allocation7 + $0x60] sm:$0xff]
    %v163 = vld [vmem:[#allocation7 + $0x68] sm:$0xff]
    %v164 = vld [vmem:[#allocation7 + $0x70] sm:$0xff]
    %v165 = vld [vmem:[#allocation7 + $0x78] sm:$0xff]
    %166 = vmatprep.subr.mxu0 0.0
    %167 = vmatpush1.msra.mxu0 %v150
    %168 = vmatprep.subr.mxu0 0.0
    %169 = vmatpush1.msra.mxu0 %v151
    %170 = vmatprep.subr.mxu0 0.0
    %171 = vmatpush1.msra.mxu0 %v152
    %172 = vmatprep.subr.mxu0 0.0
    %173 = vmatpush1.msra.mxu0 %v153
    %174 = vmatprep.subr.mxu0 0.0
    %175 = vmatpush1.msra.mxu0 %v154
    %176 = vmatprep.subr.mxu0 0.0
    %177 = vmatpush1.msra.mxu0 %v155
    %178 = vmatprep.subr.mxu0 0.0
    %179 = vmatpush1.msra.mxu0 %v156
    %180 = vmatprep.subr.mxu0 0.0
    %181 = vmatpush1.msra.mxu0 %v157
    %182 = vmatprep.subr.mxu0 0.0
    %183 = vmatpush1.msra.mxu0 %v158
    %184 = vmatprep.subr.mxu0 0.0
    %185 = vmatpush1.msra.mxu0 %v159
    %186 = vmatprep.subr.mxu0 0.0
    %187 = vmatpush1.msra.mxu0 %v160
    %188 = vmatprep.subr.mxu0 0.0
    %189 = vmatpush1.msra.mxu0 %v161
    %190 = vmatprep.subr.mxu0 0.0
    %191 = vmatpush1.msra.mxu0 %v162
    %192 = vmatprep.subr.mxu0 0.0
    %193 = vmatpush1.msra.mxu0 %v163
    %194 = vmatprep.subr.mxu0 0.0
    %195 = vmatpush1.msra.mxu0 %v164
    %196 = vmatprep.subr.mxu0 0.0
    %197 = vmatpush1.msra.mxu0 %v165
    %198 = vmatprep.subr.mxu0 0.0
    %199 = vmatpush1.msra.mxu0 0.0
    %200 = vmatprep.subr.mxu0 0.0
    %201 = vmatpush1.msra.mxu0 0.0
    %202 = vmatprep.subr.mxu0 0.0
    %203 = vmatpush1.msra.mxu0 0.0
    %204 = vmatprep.subr.mxu0 0.0
    %205 = vmatpush1.msra.mxu0 0.0
    %206 = vmatprep.subr.mxu0 0.0
    %207 = vmatpush1.msra.mxu0 0.0
    %208 = vmatprep.subr.mxu0 0.0
    %209 = vmatpush1.msra.mxu0 0.0
    %210 = vmatprep.subr.mxu0 0.0
    %211 = vmatpush1.msra.mxu0 0.0
    %212 = vmatprep.subr.mxu0 0.0
    %213 = vmatpush1.msra.mxu0 0.0
    %214 = vmatprep.subr.mxu0 0.0
    %215 = vmatpush1.msra.mxu0 0.0
    %216 = vmatprep.subr.mxu0 0.0
    %217 = vmatpush1.msra.mxu0 0.0
    %218 = vmatprep.subr.mxu0 0.0
    %219 = vmatpush1.msra.mxu0 0.0
    %220 = vmatprep.subr.mxu0 0.0
    %221 = vmatpush1.msra.mxu0 0.0
    %222 = vmatprep.subr.mxu0 0.0
    %223 = vmatpush1.msra.mxu0 0.0
    %224 = vmatprep.subr.mxu0 0.0
    %225 = vmatpush1.msra.mxu0 0.0
    %226 = vmatprep.subr.mxu0 0.0
    %227 = vmatpush1.msra.mxu0 0.0
    %228 = vmatprep.subr.mxu0 0.0
    %229 = vmatpush1.msra.mxu0 0.0
    %230 = vmatprep.mubr.f32.mxu0 0.0
    %231 = vmatmul.mubr.f32.gmra.mrb[0].mxu0 %v148
    %v232 = vpop.f32.mrb[0].mxu0
    %v233 = vadd.f32 0.0, %v232
    %v234 = vpop.f32.mrb[0].mxu0
    %235 = vmatprep.mubr.f32.mxu0 0.0
    %236 = vmatmul.mubr.f32.gmra.mrb[0].mxu0 %v149
    %v237 = vpop.f32.mrb[0].mxu0
    %v238 = vadd.f32 0.0, %v237
    %v239 = vpop.f32.mrb[0].mxu0
    %240 = vdwg.mxu0
    %vm241 = vcmp.ge.f32.partialorder %v233, 1.0
    %vm242 = vcmp.ge.f32.partialorder %v238, 1.0
    %v243 = vsel %vm241, 1, 0
    %v244 = vsel %vm242, 1, 0
    %v245 = vcvt.s32.f32 %v243
    %v246 = vcvt.s32.f32 %v244
    %247 = vst [vmem:[#allocation8] sm:$0xff] %v245
    %248 = vst [vmem:[#allocation8 + $0x8] sm:$0xff] %v246
    // Predicated region
    $region26: #{tpu_custom_call.1} parent=1 // pred_check
      _
    $region27: #{tpu_custom_call.1} parent=1 // pred_check_branch
      %250 = sbr.rel (0) target = $region29
    $region28: #{tpu_custom_call.1} parent=1 // pred_region
      %s252 = ssub.s32 256, 256
      %253 = vsyncadd [#allocation4], %s252
      %s254 = sshll.u32 [#allocation8], 4
      %s255 = int_to_ptr.vmem [resolvable:$true] %s254
      %260 = dma.vmem_to_hbm [thread:$0]  %s255, 256, %s3, [#allocation4], 128, 128, 8
    $region29: #{tpu_custom_call.1} parent=1 // pred_fallthru
      _
    // Predicated region
    $region30: #{tpu_custom_call.1} parent=1 // pred_check
      _
    $region31: #{tpu_custom_call.1} parent=1 // pred_check_branch
      %262 = sbr.rel (0) target = $region33
    $region32: #{tpu_custom_call.1} parent=1 // pred_region
      %263 = dma.done [#allocation4], 256
    $region33: #{tpu_custom_call.1} parent=1 // pred_fallthru
      _
    %264 = vsyncpa [#allocation3], 1
    %265 = vsyncpa [#allocation6], 1
    %266 = vsyncpa [#allocation4], 1

</llo_original>
